<compile_context>
chip_gen: v7x
topology: tpu7x:2x2x1
jax: 0.10.0
libtpu: 0.0.40
codegen_flags: <defaults>
</compile_context>

<pallas_src>
import functools

import jax
import jax.numpy as jnp
from jax.experimental import pallas as pl
from jax.experimental.pallas import tpu as pltpu


def _contrastive_kernel(x0_ref, x1_ref, out_ref, acc_d2_ref, acc_h2_ref, *,
                        margin, batch, block_rows, tiles_per_core,
                        num_row_tiles, needs_mask):
    c = pl.program_id(0)          # partial-sum ("core") axis, parallel
    i = pl.program_id(1)          # row-tile axis within this core, reduction

    @pl.when(i == 0)
    def _init():
        acc_d2_ref[...] = jnp.zeros_like(acc_d2_ref)
        acc_h2_ref[...] = jnp.zeros_like(acc_h2_ref)

    # Load in native dtype (narrow HBM traffic), compute in f32.
    x0 = x0_ref[...].astype(jnp.float32)
    x1 = x1_ref[...].astype(jnp.float32)
    diff = x0 - x1 + jnp.float32(1e-6)                   # torch pairwise_distance eps
    d2 = jnp.sum(diff * diff, axis=1, keepdims=True)     # (TB, 1) == distance^2
    d = jnp.sqrt(d2)                                     # euclidean_distance
    hinge = jnp.maximum(jnp.float32(margin) - d, 0.0)    # clamp(margin - d, min=0)
    h2 = hinge * hinge

    if needs_mask:
        t = c * tiles_per_core + i                       # global row-tile id
        last = num_row_tiles - 1

        @pl.when(t < last)                               # full tiles: zero mask cost
        def _accum_full():
            acc_d2_ref[...] += d2
            acc_h2_ref[...] += h2

        @pl.when(t >= last)                              # edge / overrun tiles
        def _accum_masked():
            row = t * block_rows + jax.lax.broadcasted_iota(
                jnp.int32, (block_rows, 1), 0)
            valid = row < batch
            # jnp.where (not multiply): garbage rows in a partial block may be
            # NaN/Inf; select never propagates them.
            acc_d2_ref[...] += jnp.where(valid, d2, 0.0)
            acc_h2_ref[...] += jnp.where(valid, h2, 0.0)
    else:
        acc_d2_ref[...] += d2
        acc_h2_ref[...] += h2

    @pl.when(i == tiles_per_core - 1)
    def _finalize():
        sum_d2 = jnp.sum(acc_d2_ref[...])                # once per core
        sum_h2 = jnp.sum(acc_h2_ref[...])
        lane = jax.lax.broadcasted_iota(jnp.int32, out_ref.shape, 2)
        # Lane 0 <- sum(d^2) partial, lane 1 <- sum(hinge^2) partial.
        out_ref[...] = jnp.where(lane == 0, sum_d2,
                                 jnp.where(lane == 1, sum_h2, 0.0))


def _row_multiple(dtype):
    itemsize = jnp.dtype(dtype).itemsize
    # Sub-32-bit dtypes pack 2/4 rows per sublane: 8 f32, 16 bf16, 32 int8/fp8.
    return 8 * max(1, 4 // itemsize)


def _choose_block_rows(batch, dim, dtype):
    itemsize = jnp.dtype(dtype).itemsize
    mult = _row_multiple(dtype)
    # Target ~2 MiB per input buffer (2 inputs x 2 pipeline buffers <= 8 MiB)
    # so per-grid-step overhead (~0.35 us) is amortized; cap at 4096 rows so the
    # (TB, 1) f32 accumulators (lane-padded to 128) stay small.
    target_bytes = 2 * 1024 * 1024
    tb = (target_bytes // max(1, dim * itemsize)) // mult * mult
    tb = max(mult, min(tb, 4096))
    if batch <= tb:
        return batch, mult        # single block == full row dim: always legal
    return tb, mult


def contrastive_loss(output1, output2, label, margin=1.0, block_rows=None):
    assert output1.ndim == 2 and output2.ndim == 2 and label.ndim == 1
    assert output1.shape == output2.shape
    assert output1.shape[0] == label.shape[0] and label.shape[0] > 0

    B, D = output1.shape
    itemsize = jnp.dtype(output1.dtype).itemsize
    tb_auto, mult = _choose_block_rows(B, D, output1.dtype)
    if block_rows is None:
        tb = tb_auto
    else:
        tb = int(block_rows)
        tb = B if tb >= B else max(mult, (tb // mult) * mult)

    num_row_tiles = pl.cdiv(B, tb)
    num_cores = 2 if num_row_tiles >= 2 else 1   # v7x: one partial sum per TC
    tiles_per_core = pl.cdiv(num_row_tiles, num_cores)
    needs_mask = (num_cores * tiles_per_core * tb) != B

    last_block = num_row_tiles - 1

    def row_map(c, i):
        # Clamp overrun tiles (odd tile count on the 2-way split) back into
        # range; their rows are masked out inside the kernel.
        return (jnp.minimum(c * tiles_per_core + i, last_block), 0)

    kernel = functools.partial(
        _contrastive_kernel, margin=float(margin), batch=B, block_rows=tb,
        tiles_per_core=tiles_per_core, num_row_tiles=num_row_tiles,
        needs_mask=needs_mask)

    cost = pl.CostEstimate(
        flops=5 * B * D + 8 * B,
        transcendentals=B,                                    # one sqrt per row
        bytes_accessed=2 * B * D * itemsize + num_cores * 8 * 128 * 4)

    partials = pl.pallas_call(
        kernel,
        out_shape=jax.ShapeDtypeStruct((num_cores, 8, 128), jnp.float32),
        grid_spec=pltpu.PrefetchScalarGridSpec(
            num_scalar_prefetch=0,
            grid=(num_cores, tiles_per_core),
            in_specs=[
                pl.BlockSpec((tb, D), row_map),
                pl.BlockSpec((tb, D), row_map),
            ],
            out_specs=pl.BlockSpec((1, 8, 128), lambda c, i: (c, 0, 0)),
            scratch_shapes=[pltpu.VMEM((tb, 1), jnp.float32),
                            pltpu.VMEM((tb, 1), jnp.float32)]),
        compiler_params=pltpu.CompilerParams(
            dimension_semantics=("parallel", "arbitrary"),
            vmem_limit_bytes=32 * 1024 * 1024),
        cost_estimate=cost,
    )(output1, output2)

    # Label handling hoisted out of the kernel:
    #   mean over the (B, B) broadcast ==
    #   [(B - sum(label)) * sum(d^2) + sum(label) * sum(hinge^2)] / B^2
    sum_d2 = jnp.sum(partials[:, 0, 0])
    sum_h2 = jnp.sum(partials[:, 0, 1])
    sum_lab = jnp.sum(label.astype(jnp.float32))
    b_f = jnp.float32(B)
    return ((b_f - sum_lab) * sum_d2 + sum_lab * sum_h2) / (b_f * b_f)


def _reference(output1, output2, label, margin=1.0):
    # Pure-JAX mirror of the PyTorch forward (incl. the (B,B) broadcast).
    eps = 1e-6
    x0 = output1.astype(jnp.float32)
    x1 = output2.astype(jnp.float32)
    d = jnp.sqrt(jnp.sum((x0 - x1 + eps) ** 2, axis=1, keepdims=True))   # (B,1)
    lab = label.astype(jnp.float32).reshape(1, -1)
    return jnp.mean((1.0 - lab) * d**2 + lab * jnp.maximum(margin - d, 0.0) ** 2)


if __name__ == "__main__":
    key = jax.random.PRNGKey(0)
    ks = jax.random.split(key, 9)

    # Case 1: single full tile (B=8, D=32, f32).
    B, D = 8, 32
    x0 = jax.random.normal(ks[0], (B, D), dtype=jnp.float32)
    x1 = jax.random.normal(ks[1], (B, D), dtype=jnp.float32)
    y = jax.random.bernoulli(ks[2], 0.5, (B,)).astype(jnp.float32)
    loss = jax.block_until_ready(contrastive_loss(x0, x1, y, margin=1.0))
    ref = _reference(x0, x1, y, margin=1.0)
    assert jnp.allclose(loss, ref, rtol=1e-5, atol=1e-4), (loss, ref)

    # Case 2: forced small tile -> 2-way partial-sum split, clamped overrun
    # tile and in-kernel edge masking (B=20, TB=8 -> 3 genuine tiles, no pad).
    B2, D2 = 20, 32
    x0b = jax.random.normal(ks[3], (B2, D2), dtype=jnp.float32)
    x1b = jax.random.normal(ks[4], (B2, D2), dtype=jnp.float32)
    yb = jax.random.bernoulli(ks[5], 0.5, (B2,)).astype(jnp.float32)
    loss2 = jax.block_until_ready(
        contrastive_loss(x0b, x1b, yb, margin=1.0, block_rows=8))
    ref2 = _reference(x0b, x1b, yb, margin=1.0)
    assert jnp.allclose(loss2, ref2, rtol=1e-5, atol=1e-4), (loss2, ref2)

    # Case 3: bf16 inputs streamed in native dtype (16-row sublane packing).
    x0c = jax.random.normal(ks[6], (B2, D2), dtype=jnp.float32).astype(jnp.bfloat16)
    x1c = jax.random.normal(ks[7], (B2, D2), dtype=jnp.float32).astype(jnp.bfloat16)
    yc = jax.random.bernoulli(ks[8], 0.5, (B2,)).astype(jnp.float32)
    loss3 = jax.block_until_ready(contrastive_loss(x0c, x1c, yc, margin=1.0))
    ref3 = _reference(x0c, x1c, yc, margin=1.0)
    assert jnp.allclose(loss3, ref3, rtol=1e-4, atol=1e-3), (loss3, ref3)

    print("KERNEL_OK")
</pallas_src>

<mosaic_0001>
module attributes {stable_mosaic.version = 11 : i64} {
  func.func @_contrastive_kernel(%arg0: i32, %arg1: i32, %arg2: memref<8x32xf32, #tpu.memory_space<vmem>>, %arg3: memref<8x32xf32, #tpu.memory_space<vmem>>, %arg4: memref<1x8x128xf32, #tpu.memory_space<vmem>>, %arg5: memref<8x1xf32, #tpu.memory_space<vmem>>, %arg6: memref<8x1xf32, #tpu.memory_space<vmem>>) attributes {dimension_semantics = [#tpu.dimension_semantics<parallel>, #tpu.dimension_semantics<arbitrary>], iteration_bounds = array<i64: 1, 1>, scalar_prefetch = 0 : i64, scratch_operands = 2 : i64, tpu.core_type = #tpu.core_type<tc>, window_params = [{transform_indices = @transform_0, window_bounds = array<i64: 8, 32>}, {transform_indices = @transform_1, window_bounds = array<i64: 8, 32>}, {transform_indices = @transform_2, window_bounds = array<i64: 1, 8, 128>}]} {
    %c0_i32 = arith.constant 0 : i32
    %0 = arith.cmpi eq, %arg1, %c0_i32 : i32
    %1 = arith.extui %0 : i1 to i32
    %c0_i32_0 = arith.constant 0 : i32
    %2 = arith.cmpi ne, %1, %c0_i32_0 : i32
    scf.if %2 {
      %cst_17 = arith.constant 0.000000e+00 : f32
      %26 = vector.broadcast %cst_17 : f32 to vector<8x1xf32>
      %c0_18 = arith.constant 0 : index
      %c0_19 = arith.constant 0 : index
      %27 = vector.load %arg5[%c0_18, %c0_19] : memref<8x1xf32, #tpu.memory_space<vmem>>, vector<8x1xf32>
      tpu.vector_store %arg5[%c0_18, %c0_19], %26 {strides = array<i32>} : memref<8x1xf32, #tpu.memory_space<vmem>>, vector<8x1xf32>,
      %cst_20 = arith.constant 0.000000e+00 : f32
      %28 = vector.broadcast %cst_20 : f32 to vector<8x1xf32>
      %c0_21 = arith.constant 0 : index
      %c0_22 = arith.constant 0 : index
      %29 = vector.load %arg6[%c0_21, %c0_22] : memref<8x1xf32, #tpu.memory_space<vmem>>, vector<8x1xf32>
      tpu.vector_store %arg6[%c0_21, %c0_22], %28 {strides = array<i32>} : memref<8x1xf32, #tpu.memory_space<vmem>>, vector<8x1xf32>,
    } else {
    }
    %c0 = arith.constant 0 : index
    %c0_1 = arith.constant 0 : index
    %3 = vector.load %arg2[%c0, %c0_1] : memref<8x32xf32, #tpu.memory_space<vmem>>, vector<8x32xf32>
    %c0_2 = arith.constant 0 : index
    %c0_3 = arith.constant 0 : index
    %4 = vector.load %arg3[%c0_2, %c0_3] : memref<8x32xf32, #tpu.memory_space<vmem>>, vector<8x32xf32>
    %5 = arith.subf %3, %4 : vector<8x32xf32>
    %cst = arith.constant 9.99999997E-7 : f32
    %6 = vector.broadcast %cst : f32 to vector<8x32xf32>
    %7 = arith.addf %5, %6 : vector<8x32xf32>
    %8 = arith.mulf %7, %7 : vector<8x32xf32>
    %cst_4 = arith.constant dense<0.000000e+00> : vector<8xf32>
    %9 = vector.multi_reduction <add>, %8, %cst_4 [1] : vector<8x32xf32> to vector<8xf32>
    %10 = vector.shape_cast %9 : vector<8xf32> to vector<8x1xf32>
    %11 = math.sqrt %10 : vector<8x1xf32>
    %cst_5 = arith.constant 1.000000e+00 : f32
    %12 = vector.broadcast %cst_5 : f32 to vector<8x1xf32>
    %13 = arith.subf %12, %11 : vector<8x1xf32>
    %cst_6 = arith.constant 0.000000e+00 : f32
    %14 = vector.broadcast %cst_6 : f32 to vector<8x1xf32>
    %15 = arith.maximumf %13, %14 : vector<8x1xf32>
    %16 = arith.mulf %15, %15 : vector<8x1xf32>
    %c0_7 = arith.constant 0 : index
    %c0_8 = arith.constant 0 : index
    %17 = vector.load %arg5[%c0_7, %c0_8] : memref<8x1xf32, #tpu.memory_space<vmem>>, vector<8x1xf32>
    %18 = arith.addf %17, %10 : vector<8x1xf32>
    %c0_9 = arith.constant 0 : index
    %c0_10 = arith.constant 0 : index
    %19 = vector.load %arg5[%c0_9, %c0_10] : memref<8x1xf32, #tpu.memory_space<vmem>>, vector<8x1xf32>
    tpu.vector_store %arg5[%c0_9, %c0_10], %18 {strides = array<i32>} : memref<8x1xf32, #tpu.memory_space<vmem>>, vector<8x1xf32>,
    %c0_11 = arith.constant 0 : index
    %c0_12 = arith.constant 0 : index
    %20 = vector.load %arg6[%c0_11, %c0_12] : memref<8x1xf32, #tpu.memory_space<vmem>>, vector<8x1xf32>
    %21 = arith.addf %20, %16 : vector<8x1xf32>
    %c0_13 = arith.constant 0 : index
    %c0_14 = arith.constant 0 : index
    %22 = vector.load %arg6[%c0_13, %c0_14] : memref<8x1xf32, #tpu.memory_space<vmem>>, vector<8x1xf32>
    tpu.vector_store %arg6[%c0_13, %c0_14], %21 {strides = array<i32>} : memref<8x1xf32, #tpu.memory_space<vmem>>, vector<8x1xf32>,
    %c0_i32_15 = arith.constant 0 : i32
    %23 = arith.cmpi eq, %arg1, %c0_i32_15 : i32
    %24 = arith.extui %23 : i1 to i32
    %c0_i32_16 = arith.constant 0 : i32
    %25 = arith.cmpi ne, %24, %c0_i32_16 : i32
    scf.if %25 {
      %c0_17 = arith.constant 0 : index
      %c0_18 = arith.constant 0 : index
      %26 = vector.load %arg5[%c0_17, %c0_18] : memref<8x1xf32, #tpu.memory_space<vmem>>, vector<8x1xf32>
      %27 = vector.shape_cast %26 : vector<8x1xf32> to vector<1x8x1xf32>
      %cst_19 = arith.constant dense<0.000000e+00> : vector<1xf32>
      %28 = vector.multi_reduction <add>, %27, %cst_19 [1, 2] : vector<1x8x1xf32> to vector<1xf32>
      %29 = vector.shape_cast %28 : vector<1xf32> to vector<1x1x1xf32>
      %30 = vector.extract %29[0, 0, 0] : f32 from vector<1x1x1xf32>
      %c0_20 = arith.constant 0 : index
      %c0_21 = arith.constant 0 : index
      %31 = vector.load %arg6[%c0_20, %c0_21] : memref<8x1xf32, #tpu.memory_space<vmem>>, vector<8x1xf32>
      %32 = vector.shape_cast %31 : vector<8x1xf32> to vector<1x8x1xf32>
      %cst_22 = arith.constant dense<0.000000e+00> : vector<1xf32>
      %33 = vector.multi_reduction <add>, %32, %cst_22 [1, 2] : vector<1x8x1xf32> to vector<1xf32>
      %34 = vector.shape_cast %33 : vector<1xf32> to vector<1x1x1xf32>
      %35 = vector.extract %34[0, 0, 0] : f32 from vector<1x1x1xf32>
      %36 = tpu.iota {dimensions = array<i32: 2>} : vector<1x8x128xi32>
      %c0_i32_23 = arith.constant 0 : i32
      %37 = vector.broadcast %c0_i32_23 : i32 to vector<1x8x128xi32>
      %38 = arith.cmpi eq, %36, %37 : vector<1x8x128xi32>
      %c1_i32 = arith.constant 1 : i32
      %39 = vector.broadcast %c1_i32 : i32 to vector<1x8x128xi32>
      %40 = arith.cmpi eq, %36, %39 : vector<1x8x128xi32>
      %cst_24 = arith.constant 0.000000e+00 : f32
      %41 = vector.broadcast %35 : f32 to vector<1x8x128xf32>
      %42 = vector.broadcast %cst_24 : f32 to vector<1x8x128xf32>
      %43 = arith.select %40, %41, %42 : vector<1x8x128xi1>, vector<1x8x128xf32>
      %44 = vector.broadcast %30 : f32 to vector<1x8x128xf32>
      %45 = arith.select %38, %44, %43 : vector<1x8x128xi1>, vector<1x8x128xf32>
      %c0_25 = arith.constant 0 : index
      %c0_26 = arith.constant 0 : index
      %c0_27 = arith.constant 0 : index
      %46 = vector.load %arg4[%c0_25, %c0_26, %c0_27] : memref<1x8x128xf32, #tpu.memory_space<vmem>>, vector<1x8x128xf32>
      tpu.vector_store %arg4[%c0_25, %c0_26, %c0_27], %45 {strides = array<i32>} : memref<1x8x128xf32, #tpu.memory_space<vmem>>, vector<1x8x128xf32>,
    } else {
    }
    return
  }
  func.func @transform_0(%arg0: i32, %arg1: i32) -> (i32, i32) {
    %c1_i32 = arith.constant 1 : i32
    %0 = arith.muli %arg0, %c1_i32 : i32
    %1 = arith.addi %0, %arg1 : i32
    %c0_i32 = arith.constant 0 : i32
    %2 = arith.minsi %1, %c0_i32 : i32
    %c0_i32_0 = arith.constant 0 : i32
    %c0_i32_1 = arith.constant 0 : i32
    return %2, %c0_i32_0 : i32, i32
  }
  func.func @transform_1(%arg0: i32, %arg1: i32) -> (i32, i32) {
    %c1_i32 = arith.constant 1 : i32
    %0 = arith.muli %arg0, %c1_i32 : i32
    %1 = arith.addi %0, %arg1 : i32
    %c0_i32 = arith.constant 0 : i32
    %2 = arith.minsi %1, %c0_i32 : i32
    %c0_i32_0 = arith.constant 0 : i32
    %c0_i32_1 = arith.constant 0 : i32
    return %2, %c0_i32_0 : i32, i32
  }
  func.func @transform_2(%arg0: i32, %arg1: i32) -> (i32, i32, i32) {
    %c0_i32 = arith.constant 0 : i32
    %c0_i32_0 = arith.constant 0 : i32
    %c0_i32_1 = arith.constant 0 : i32
    return %arg0, %c0_i32, %c0_i32_0 : i32, i32, i32
  }
}

</mosaic_0001>

<llo_original>
// kernel: tpu_custom_call.1
$region0: #{tpu_custom_call.1}
  #allocation0 [shape = 'u32[]', space=smem, size = 0x4, offset = 0x4, fixed_abs, tag = 'smem constant byte address 0x4 - core index']
  #allocation1 [shape = 'u32[144,128]{1,0:T(1,128)}', space=vmem, size = 0x12000, scoped, tag = 'internal scratch']
  #allocation2 [shape = 'f32[8,1]{1,0:T(8,128)}', space=vmem, size = 0x1000, scoped, tag = 'scratch operand']
  #allocation3 [shape = 'f32[8,1]{1,0:T(8,128)}', space=vmem, size = 0x1000, scoped, tag = 'scratch operand']
  %s0 = inlined_call_operand.hbm [shape: f32[8,32], index: 0, kind: input, shape index: {}]
  %s1 = inlined_call_operand.hbm [shape: f32[8,32], index: 1, kind: input, shape index: {}]
  %s2 = inlined_call_operand.hbm [shape: f32[1,8,128], index: 2, kind: output, shape index: {}]
  %s3 = sld [smem:[#allocation0]]
  $region34: #{tpu_custom_call.1} parent=0
    _
  %s5 = ssub.s32 1, %s3
  %s6 = scalar_select 0, %s5, %s3
  $region1: #{tpu_custom_call.1} parent=0
    #allocation4 [shape = 'u8[4096]{0}', space=vmem, size = 0x1000, scoped, tag = 'input window, operand 0, single buffered']
    #allocation5 [shape = 's32[1]{0}', space=sflag, size = 0x4, scoped, tag = 'scoped memory for tpu_custom_call.1']
    #allocation6 [shape = 's32[1]{0}', space=sflag, size = 0x4, scoped, tag = 'scoped memory for tpu_custom_call.1']
    #allocation7 [shape = 'u8[4096]{0}', space=vmem, size = 0x1000, scoped, tag = 'input window, operand 1, single buffered']
    #allocation8 [shape = 's32[1]{0}', space=sflag, size = 0x4, scoped, tag = 'scoped memory for tpu_custom_call.1']
    #allocation9 [shape = 'u8[4096]{0}', space=vmem, size = 0x1000, scoped, tag = 'output window, operand 0, single buffered']
    %7 = vsyncpa [#allocation5], 0
    %8 = vsyncpa [#allocation8], 0
    %9 = vsyncpa [#allocation6], 0
    // Predicated region
    $region2: #{tpu_custom_call.1} parent=1 // pred_check
      _
    $region3: #{tpu_custom_call.1} parent=1 // pred_check_branch
      %11 = sbr.rel (0) target = $region5
    $region4: #{tpu_custom_call.1} parent=1 // pred_region
      %s12 = sadd.s32 0, 0
      %p13 = scmp.lt.s32.totalorder %s12, 0
      %s14 = scalar_select %p13, %s12, 0
      %s16 = ssub.s32 128, 128
      %17 = vsyncadd [#allocation5], %s16
      %s18 = smul.addr %s14, 128
      %s19 = scalar_lea.hbm %s0, %s18
      %s21 = sshll.u32 [#allocation4], 4
      %s22 = int_to_ptr.vmem [resolvable:$true] %s21
      %24 = dma.hbm_to_vmem [thread:$0]  %s19, 128, %s22, [#allocation5]
    $region5: #{tpu_custom_call.1} parent=1 // pred_fallthru
      _
    // Predicated region
    $region6: #{tpu_custom_call.1} parent=1 // pred_check
      _
    $region7: #{tpu_custom_call.1} parent=1 // pred_check_branch
      %26 = sbr.rel (0) target = $region9
    $region8: #{tpu_custom_call.1} parent=1 // pred_region
      %s27 = sadd.s32 0, 0
      %p28 = scmp.lt.s32.totalorder %s27, 0
      %s29 = scalar_select %p28, %s27, 0
      %s31 = ssub.s32 128, 128
      %32 = vsyncadd [#allocation8], %s31
      %s33 = smul.addr %s29, 128
      %s34 = scalar_lea.hbm %s1, %s33
      %s36 = sshll.u32 [#allocation7], 4
      %s37 = int_to_ptr.vmem [resolvable:$true] %s36
      %39 = dma.hbm_to_vmem [thread:$0]  %s34, 128, %s37, [#allocation8]
    $region9: #{tpu_custom_call.1} parent=1 // pred_fallthru
      _
    // Predicated region
    $region10: #{tpu_custom_call.1} parent=1 // pred_check
      _
    $region11: #{tpu_custom_call.1} parent=1 // pred_check_branch
      %41 = sbr.rel (0) target = $region13
    $region12: #{tpu_custom_call.1} parent=1 // pred_region
      %42 = dma.done [#allocation5], 128
    $region13: #{tpu_custom_call.1} parent=1 // pred_fallthru
      _
    // Predicated region
    $region14: #{tpu_custom_call.1} parent=1 // pred_check
      _
    $region15: #{tpu_custom_call.1} parent=1 // pred_check_branch
      %44 = sbr.rel (0) target = $region17
    $region16: #{tpu_custom_call.1} parent=1 // pred_region
      %45 = dma.done [#allocation8], 128
    $region17: #{tpu_custom_call.1} parent=1 // pred_fallthru
      _
    %s46 = sadd.s32 0, 0
    %p47 = scmp.lt.s32.totalorder %s46, 0
    %s48 = scalar_select %p47, %s46, 0
    %s49 = sadd.s32 0, 0
    %p50 = scmp.lt.s32.totalorder %s49, 0
    %s51 = scalar_select %p50, %s49, 0
    %p52 = scmp.eq.s32.totalorder 0, 0
    // Predicated region
    $region18: #{tpu_custom_call.1} parent=1 // pred_check
      %p53 = pneg %p52
    $region19: #{tpu_custom_call.1} parent=1 // pred_check_branch
      %55 = sbr.rel (%p53) target = $region21
    $region20: #{tpu_custom_call.1} parent=1 // pred_region
      %vm56 = vcmask 7168
      %57 = vst.msk [vmem:[#allocation2] sm:$0xff] %vm56, 0.0
      %58 = vst.msk [vmem:[#allocation3] sm:$0xff] %vm56, 0.0
    $region21: #{tpu_custom_call.1} parent=1 // pred_fallthru
      _
    %v59 = vld [vmem:[#allocation4] sm:$0xff]
    %v60 = vld [vmem:[#allocation7] sm:$0xff]
    %v61 = vsub.f32 %v59, %v60
    %v62 = vadd.f32 %v61, 1e-06
    %v63 = vmul.f32 %v62, %v62
    %vm64 = vcmask 261120
    %v65 = vsel %vm64, %v63, 0.0
    %66 = vadd.xlane.f32.xlu0 %v65
    %v67 = vpop.xlane.xlu0 %66
    %v68 = vrsqrt.pop %v67
    %v69 = vmul.f32 %v67, %v68
    %vm70 = vcmp.eq.f32.partialorder %v67, inf
    %v71 = vsel %vm70, %v67, %v69
    %vm72 = vcmp.eq.f32.partialorder %v67, 0.0
    %v73 = vand.u32 %v67, 2147483648
    %v74 = vsel %vm72, %v73, %v71
    %v75 = vsub.f32 1.0, %v74
    %v76 = vmax.f32 %v75, 0.0
    %v77 = vmul.f32 %v76, %v76
    %v78 = vld [vmem:[#allocation2] sm:$0xff]
    %v79 = vadd.f32 %v78, %v67
    %vm80 = vcmask 7168
    %81 = vst.msk [vmem:[#allocation2] sm:$0xff] %vm80, %v79
    %v82 = vld [vmem:[#allocation3] sm:$0xff]
    %v83 = vadd.f32 %v82, %v77
    %84 = vst.msk [vmem:[#allocation3] sm:$0xff] %vm80, %v83
    // Predicated region
    $region22: #{tpu_custom_call.1} parent=1 // pred_check
      %p85 = pneg %p52
    $region23: #{tpu_custom_call.1} parent=1 // pred_check_branch
      %87 = sbr.rel (%p85) target = $region25
    $region24: #{tpu_custom_call.1} parent=1 // pred_region
      %v88 = vld [vmem:[#allocation2] sm:$0xff]
      %v89 = vsel %vm80, %v88, 0.0
      %90 = vadd.xlane.f32.xlu0 %v89
      %v91 = vpop.xlane.xlu0 %90
      %v92 = vrot.slane %v91, 4
      %v93 = vadd.f32 %v91, %v92
      %v94 = vrot.slane %v93, 2
      %v95 = vadd.f32 %v93, %v94
      %v96 = vrot.slane %v95, 1
      %v97 = vadd.f32 %v95, %v96
      %s98 = vtos %v97
      %v99 = vld [vmem:[#allocation3] sm:$0xff]
      %v100 = vsel %vm80, %v99, 0.0
      %101 = vadd.xlane.f32.xlu0 %v100
      %v102 = vpop.xlane.xlu0 %101
      %v103 = vrot.slane %v102, 4
      %v104 = vadd.f32 %v102, %v103
      %v105 = vrot.slane %v104, 2
      %v106 = vadd.f32 %v104, %v105
      %v107 = vrot.slane %v106, 1
      %v108 = vadd.f32 %v106, %v107
      %s109 = vtos %v108
      %v110 = vlaneseq
      %v111 = vand.u32 %v110, 127
      %vm112 = vcmp.eq.s32.totalorder %v111, 0
      %vm113 = vcmp.eq.s32.totalorder %v111, 1
      %v114 = vstv %s109
      %v115 = vsel %vm113, %v114, 0.0
      %v116 = vstv %s98
      %v117 = vsel %vm112, %v116, %v115
      %118 = vst [vmem:[#allocation9] sm:$0xff] %v117
    $region25: #{tpu_custom_call.1} parent=1 // pred_fallthru
      _
    // Predicated region
    $region26: #{tpu_custom_call.1} parent=1 // pred_check
      _
    $region27: #{tpu_custom_call.1} parent=1 // pred_check_branch
      %120 = sbr.rel (0) target = $region29
    $region28: #{tpu_custom_call.1} parent=1 // pred_region
      %s122 = ssub.s32 128, 128
      %123 = vsyncadd [#allocation6], %s122
      %s125 = sshll.u32 [#allocation9], 4
      %s126 = int_to_ptr.vmem [resolvable:$true] %s125
      %128 = dma.vmem_to_hbm [thread:$0]  %s126, 128, %s2, [#allocation6]
    $region29: #{tpu_custom_call.1} parent=1 // pred_fallthru
      _
    // Predicated region
    $region30: #{tpu_custom_call.1} parent=1 // pred_check
      _
    $region31: #{tpu_custom_call.1} parent=1 // pred_check_branch
      %130 = sbr.rel (0) target = $region33
    $region32: #{tpu_custom_call.1} parent=1 // pred_region
      %131 = dma.done [#allocation6], 128
    $region33: #{tpu_custom_call.1} parent=1 // pred_fallthru
      _
    %132 = vsyncpa [#allocation5], 1
    %133 = vsyncpa [#allocation8], 1
    %134 = vsyncpa [#allocation6], 1

</llo_original>
